<compile_context>
chip_gen: v7x
topology: tpu7x:2x2x1
jax: 0.10.0
libtpu: 0.0.40
codegen_flags: <defaults>
</compile_context>

<pallas_src>
import jax
import jax.numpy as jnp
from jax.experimental import pallas as pl
from jax.experimental.pallas import tpu as pltpu


def _dma_copy_kernel(x_hbm_ref, o_hbm_ref, sem):
    # One linear HBM->HBM DMA covering the whole array.
    cp = pltpu.make_async_copy(x_hbm_ref, o_hbm_ref, sem)
    cp.start()
    cp.wait()


def add_channel_dim(x: jax.Array) -> jax.Array:
    """Equivalent of torch's ``x.unsqueeze(1)``.

    The Pallas kernel performs a single full-array HBM->HBM DMA copy; the
    size-1 channel axis is added by a metadata-only reshape in the wrapper.
    """
    total_bytes = x.size * jnp.dtype(x.dtype).itemsize

    y = pl.pallas_call(
        _dma_copy_kernel,
        out_shape=jax.ShapeDtypeStruct(x.shape, x.dtype),
        in_specs=[pl.BlockSpec(memory_space=pl.ANY)],
        out_specs=pl.BlockSpec(memory_space=pl.ANY),
        scratch_shapes=[pltpu.SemaphoreType.DMA],
        cost_estimate=pl.CostEstimate(
            flops=0, transcendentals=0, bytes_accessed=2 * total_bytes
        ),
    )(x)

    # Free (metadata-only) reshape: insert the channel axis at position 1.
    out_shape = (x.shape[0], 1) + tuple(x.shape[1:])
    return y.reshape(out_shape)


if __name__ == "__main__":
    key = jax.random.PRNGKey(0)

    # Primary test: (N, H, W) -> (N, 1, H, W), matching the original usage.
    N, H, W = 2, 16, 16
    x = jax.random.normal(key, (N, H, W), dtype=jnp.float32)
    y = add_channel_dim(x)
    jax.block_until_ready(y)
    ref = jnp.expand_dims(x, axis=1)
    assert y.shape == (N, 1, H, W), y.shape
    assert y.dtype == x.dtype
    assert jnp.array_equal(y, ref)

    # 4-D bf16 input: (B, C, H, W) -> (B, 1, C, H, W).
    x2 = jax.random.normal(jax.random.PRNGKey(1), (2, 4, 16, 16), dtype=jnp.bfloat16)
    y2 = add_channel_dim(x2)
    jax.block_until_ready(y2)
    assert y2.shape == (2, 1, 4, 16, 16)
    assert jnp.array_equal(y2, jnp.expand_dims(x2, axis=1))

    # Awkward shape (total not a multiple of 128, last dim < 128) —
    # the DMA path is layout/lane agnostic, so this is handled identically.
    x3 = jax.random.normal(jax.random.PRNGKey(2), (3, 5, 7), dtype=jnp.float32)
    y3 = add_channel_dim(x3)
    jax.block_until_ready(y3)
    assert y3.shape == (3, 1, 5, 7)
    assert jnp.array_equal(y3, jnp.expand_dims(x3, axis=1))

    print("KERNEL_OK")
</pallas_src>

<mosaic_0001>
module attributes {stable_mosaic.version = 11 : i64} {
  func.func @_dma_copy_kernel(%arg0: memref<2x16x16xf32, #tpu.memory_space<any>>, %arg1: memref<2x16x16xf32, #tpu.memory_space<any>>, %arg2: memref<!tpu.dma_semaphore, #tpu.memory_space<semaphore_mem>>) attributes {dimension_semantics = [], scalar_prefetch = 0 : i64, scratch_operands = 1 : i64, tpu.core_type = #tpu.core_type<tc>} {
    tpu.enqueue_dma source(%arg0 : memref<2x16x16xf32, #tpu.memory_space<any>>) target(%arg1 : memref<2x16x16xf32, #tpu.memory_space<any>>) target_semaphore(%arg2 : memref<!tpu.dma_semaphore, #tpu.memory_space<semaphore_mem>>)
    tpu.wait_dma2 semaphore(%arg2 : memref<!tpu.dma_semaphore, #tpu.memory_space<semaphore_mem>>) src(%arg0 : memref<2x16x16xf32, #tpu.memory_space<any>>) dst(%arg1 : memref<2x16x16xf32, #tpu.memory_space<any>>)
    return
  }
}

</mosaic_0001>

<llo_original>
// kernel: tpu_custom_call.1
$region0: #{tpu_custom_call.1}
  #allocation0 [shape = 'u32[]', space=smem, size = 0x4, offset = 0x4, fixed_abs, tag = 'smem constant byte address 0x4 - core index']
  #allocation1 [shape = 'u32[144,128]{1,0:T(1,128)}', space=vmem, size = 0x12000, scoped, tag = 'internal scratch']
  #allocation2 [shape = 's32[1]{0}', space=sflag, size = 0x4, scoped, tag = 'scratch operand']
  #allocation3 [shape = 's32[]', space=sflag, size = 0x4, offset = 0, fixed_abs, tag = 'sflag constant byte address 0x0 - dummy sync flag']
  #allocation4 [shape = 'u32[0]{0}', space=smem, size = 0, offset = 0, fixed_abs, tag = 'smem constant byte address 0x0 - null']
  %s0 = inlined_call_operand.hbm [shape: f32[2,16,16], index: 0, kind: input, shape index: {}]
  %s1 = inlined_call_operand.hbm [shape: f32[2,16,16], index: 1, kind: output, shape index: {}]
  %s2 = sld [smem:[#allocation0]]
  $region2: #{tpu_custom_call.1} parent=0
    _
  %s4 = ssub.s32 1, %s2
  %s5 = scalar_select 0, %s4, %s2
  %s7 = sshll.u32 1, 14
  %s8 = sxor.u32 4294967295, %s7
  %s11 = sshll.u32 3, 24
  %s12 = sxor.u32 4294967295, %s11
  %s13 = sand.u32 0, %s12
  %s15 = sor.u32 %s13, 0
  %18 = dma.general %s0, 512, %s1, [#allocation2], [#allocation3], [#allocation4], %s15, 0
  %s19 = smul.u32 2, 16
  %s20 = smul.u32 %s19, 1
  %s21 = sshll.u32 %s20, 4
  %22 = dma.done [#allocation2], %s21
  %23 = vsyncmov [#allocation2]
  %s24 = vpop.sfrf %23
  %p25 = scmp.eq.s32.totalorder %s24, 0
  %p26 = pneg %p25
  %28 = shalt.err (%p26)

</llo_original>
